<compile_context>
chip_gen: v7x
topology: tpu7x:2x2x1
jax: 0.10.0
libtpu: 0.0.40
codegen_flags: <defaults>
</compile_context>

<pallas_src>
import jax
import jax.numpy as jnp
from jax import lax
from jax.experimental import pallas as pl
from jax.experimental.pallas import tpu as pltpu


_VMEM_BUDGET_BYTES = 32 * 1024 * 1024   # conservative block budget (v5e/v6e/v7x)
_VMEM_LIMIT_BYTES = 48 * 1024 * 1024    # explicit scoped-VMEM limit (< v7x 64 MiB)


def _cam_batched_kernel(gamma_ref, xh_ref, xl_ref, out_ref):
    """Whole-image CAM for Bt batch items per grid step.

    Blocks: xh/xl/out are (Bt, C, Np); gamma is a (1,) f32 scalar in SMEM.
    """
    xh = xh_ref[...]                                    # (Bt, C, Np), native dtype
    xl = xl_ref[...]

    # energy[b] = xl[b] @ xh[b]^T : contract the lane (N) axes directly so no
    # (N, C) transpose is materialized; accumulate in f32 on the MXU.
    energy = lax.dot_general(
        xl, xh,
        dimension_numbers=(((2,), (2,)), ((0,), (0,))),
        preferred_element_type=jnp.float32)             # (Bt, C, C)

    # softmax(rowmax - energy) == exp(rowmin - energy) / sum(exp(rowmin - energy))
    # -> one reduction + one subtraction instead of two of each.  The divide is
    # on a tiny (Bt, C, 1) tensor, so keep it exact.
    row_min = jnp.min(energy, axis=-1, keepdims=True)
    expz = jnp.exp(row_min - energy)
    att = expz * pl.reciprocal(jnp.sum(expz, axis=-1, keepdims=True), approx=False)

    # out[b] = att[b] @ xh[b]; feed xh to the MXU in its native dtype.
    out = lax.dot_general(
        att.astype(xh.dtype), xh,
        dimension_numbers=(((2,), (1,)), ((0,), (0,))),
        preferred_element_type=jnp.float32)             # (Bt, C, Np)

    gamma = gamma_ref[0]
    out_ref[...] = (gamma * out + xl.astype(jnp.float32)).astype(out_ref.dtype)


def _cam_tiled_kernel(gamma_ref, xh_ref, xl_ref, out_ref, acc_ref):
    """Two-pass N-tiled CAM (one batch item per outer grid index).

    Grid = (B, 2, n_tiles).  Pass 0 accumulates the (C, C) energy over N tiles
    into acc_ref and converts it in place to the attention matrix; pass 1
    streams the tiles again and writes gamma * (att @ xh_tile) + xl_tile.
    Blocks: xh/xl/out are (1, C, Nt); gamma is (1,) in SMEM; acc_ref is (C, C) f32.
    """
    pass_idx = pl.program_id(1)          # 0 = energy accumulation, 1 = output
    t = pl.program_id(2)
    n_tiles = pl.num_programs(2)

    @pl.when(jnp.logical_and(pass_idx == 0, t == 0))
    def _():
        acc_ref[...] = jnp.zeros_like(acc_ref)

    @pl.when(pass_idx == 0)
    def _():
        acc_ref[...] += lax.dot_general(
            xl_ref[0], xh_ref[0],
            dimension_numbers=(((1,), (1,)), ((), ())),
            preferred_element_type=jnp.float32)

    @pl.when(jnp.logical_and(pass_idx == 0, t == n_tiles - 1))
    def _():
        energy = acc_ref[...]
        row_min = jnp.min(energy, axis=-1, keepdims=True)
        e = jnp.exp(row_min - energy)
        acc_ref[...] = e * pl.reciprocal(
            jnp.sum(e, axis=-1, keepdims=True), approx=False)

    @pl.when(pass_idx == 1)
    def _():
        xh = xh_ref[0]                                   # (C, Nt)
        xl = xl_ref[0]
        att = acc_ref[...]
        out = lax.dot_general(
            att.astype(xh.dtype), xh,
            dimension_numbers=(((1,), (0,)), ((), ())),
            preferred_element_type=jnp.float32)          # (C, Nt)
        gamma = gamma_ref[0]
        out_ref[0] = (gamma * out + xl.astype(jnp.float32)).astype(out_ref.dtype)


def _pick_batched_bt(B, C, Np, itemsize):
    """Largest divisor of B whose whole-image block fits the VMEM budget."""
    def footprint(bt):
        io = 3 * bt * C * Np * itemsize * 2              # in/out, double-buffered
        tmp = 2 * bt * C * Np * 4 + 4 * bt * C * C * 4   # f32 matmul out + softmax
        return io + tmp

    for bt in range(B, 0, -1):
        if B % bt == 0 and footprint(bt) <= _VMEM_BUDGET_BYTES:
            return bt
    return None


def _pick_tile_n(C, Np, itemsize):
    """Largest 128-multiple divisor of Np whose tile fits the VMEM budget."""
    n128 = Np // 128
    for k in range(n128, 0, -1):
        if n128 % k:
            continue
        nt = 128 * k
        io = 3 * C * nt * itemsize * 2
        tmp = 2 * C * nt * 4 + 3 * C * C * 4
        if io + tmp <= _VMEM_BUDGET_BYTES:
            return nt
    return 128


def cam_forward(gamma, x_high, x_low, *, force_tiled=False, tile_n=None):
    B, C_high, Hh, Wh = x_high.shape
    _, C_low, Hl, Wl = x_low.shape
    N = Hh * Wh
    # The PyTorch module implicitly requires matching flattened spatial sizes
    # and equal channels (bmm + residual); Hl == Wl only mirrors its final
    # .view(B, C, height_low, height_low) quirk.
    assert Hl * Wl == N and C_high == C_low and Hl == Wl

    C = C_high
    itemsize = jnp.dtype(x_low.dtype).itemsize
    Np = ((N + 127) // 128) * 128                        # lane-dense last dim

    xh_flat = x_high.reshape(B, C, N)
    xl_flat = x_low.reshape(B, C, N)
    if Np != N:
        pad = ((0, 0), (0, 0), (0, Np - N))
        xh_flat = jnp.pad(xh_flat, pad)                  # zero pad: no effect on
        xl_flat = jnp.pad(xl_flat, pad)                  # the contraction/result
    gamma_arr = jnp.asarray(gamma, dtype=jnp.float32).reshape(1)

    bt = None if force_tiled else _pick_batched_bt(B, C, Np, itemsize)

    if bt is not None:
        out_flat = pl.pallas_call(
            _cam_batched_kernel,
            out_shape=jax.ShapeDtypeStruct((B, C, Np), x_low.dtype),
            grid=(B // bt,),
            in_specs=[
                pl.BlockSpec(memory_space=pltpu.MemorySpace.SMEM),   # gamma
                pl.BlockSpec((bt, C, Np), lambda b: (b, 0, 0)),      # x_high
                pl.BlockSpec((bt, C, Np), lambda b: (b, 0, 0)),      # x_low
            ],
            out_specs=pl.BlockSpec((bt, C, Np), lambda b: (b, 0, 0)),
            input_output_aliases={2: 0},                  # x_low buffer -> output
            compiler_params=pltpu.CompilerParams(
                dimension_semantics=("parallel",),
                vmem_limit_bytes=_VMEM_LIMIT_BYTES),
        )(gamma_arr, xh_flat, xl_flat)
    else:
        nt = tile_n if tile_n is not None else _pick_tile_n(C, Np, itemsize)
        assert Np % nt == 0 and nt % 128 == 0
        n_tiles = Np // nt
        out_flat = pl.pallas_call(
            _cam_tiled_kernel,
            out_shape=jax.ShapeDtypeStruct((B, C, Np), x_low.dtype),
            grid=(B, 2, n_tiles),
            in_specs=[
                pl.BlockSpec(memory_space=pltpu.MemorySpace.SMEM),
                pl.BlockSpec((1, C, nt), lambda b, p, t: (b, 0, t)),
                pl.BlockSpec((1, C, nt), lambda b, p, t: (b, 0, t)),
            ],
            # During pass 0 the output block is parked at tile 0 (never written
            # back until pass 1 revisits and fully overwrites it), then pass 1
            # walks the tiles.
            out_specs=pl.BlockSpec((1, C, nt), lambda b, p, t: (b, 0, t * p)),
            scratch_shapes=[pltpu.VMEM((C, C), jnp.float32)],
            compiler_params=pltpu.CompilerParams(
                dimension_semantics=("parallel", "arbitrary", "arbitrary"),
                vmem_limit_bytes=_VMEM_LIMIT_BYTES),
        )(gamma_arr, xh_flat, xl_flat)

    if Np != N:
        out_flat = out_flat[:, :, :N]
    # matches PyTorch: out_low.view(B, C_high, height_low, height_low)
    return out_flat.reshape(B, C, Hl, Hl)


def cam_reference(gamma, x_high, x_low):
    B, C_high, _, _ = x_high.shape
    _, C_low, Hl, Wl = x_low.shape
    q = x_low.reshape(B, C_low, -1)
    k = jnp.transpose(x_high.reshape(B, C_high, -1), (0, 2, 1))
    energy = jnp.einsum('bcn,bnd->bcd', q, k)
    energy_new = jnp.max(energy, axis=-1, keepdims=True) - energy
    att = jax.nn.softmax(energy_new, axis=-1)
    v = x_high.reshape(B, C_high, -1)
    out = jnp.einsum('bcd,bdn->bcn', att, v).reshape(B, C_high, Hl, Hl)
    return gamma * out + x_low


if __name__ == "__main__":
    B, C, H, W = 2, 8, 16, 16          # in_dim = C; matched, square spatial
    key = jax.random.PRNGKey(0)
    k1, k2 = jax.random.split(key)
    x_high = jax.random.normal(k1, (B, C, H, W), dtype=jnp.float32)
    x_low = jax.random.normal(k2, (B, C, H, W), dtype=jnp.float32)

    cam_jit = jax.jit(cam_forward, static_argnames=("force_tiled", "tile_n"))

    # nn.Parameter(torch.zeros(1)) -> gamma initialized to 0.0 (deterministic)
    out = cam_jit(0.0, x_high, x_low)
    jax.block_until_ready(out)
    ref = cam_reference(0.0, x_high, x_low)
    assert out.shape == (B, C, H, H)
    assert jnp.allclose(out, ref, atol=1e-4, rtol=1e-4)

    # Non-zero gamma exercises the attention path (batched whole-image kernel).
    out2 = cam_jit(0.5, x_high, x_low)
    jax.block_until_ready(out2)
    ref2 = cam_reference(0.5, x_high, x_low)
    assert jnp.allclose(out2, ref2, atol=1e-4, rtol=1e-4)

    # Force the two-pass N-tiled kernel (the path taken when (C, N) exceeds the
    # per-step VMEM budget, e.g. v7x's 64 MiB) to validate it at a small shape.
    out3 = cam_jit(0.7, x_high, x_low, force_tiled=True, tile_n=128)
    jax.block_until_ready(out3)
    ref3 = cam_reference(0.7, x_high, x_low)
    assert jnp.allclose(out3, ref3, atol=1e-4, rtol=1e-4)

    print("KERNEL_OK")
</pallas_src>

<mosaic_0001>
module attributes {stable_mosaic.version = 11 : i64} {
  func.func @_cam_batched_kernel(%arg0: i32, %arg1: memref<1xf32, #tpu.memory_space<smem>>, %arg2: memref<2x8x256xf32, #tpu.memory_space<vmem>>, %arg3: memref<2x8x256xf32, #tpu.memory_space<vmem>>, %arg4: memref<2x8x256xf32, #tpu.memory_space<vmem>>) attributes {dimension_semantics = [#tpu.dimension_semantics<parallel>], iteration_bounds = array<i64: 1>, scalar_prefetch = 0 : i64, scratch_operands = 0 : i64, tpu.core_type = #tpu.core_type<tc>, window_params = [{transform_indices = @transform_0, window_bounds = array<i64: 1>}, {transform_indices = @transform_1, window_bounds = array<i64: 2, 8, 256>}, {transform_indices = @transform_2, window_bounds = array<i64: 2, 8, 256>}, {transform_indices = @transform_3, window_bounds = array<i64: 2, 8, 256>}]} {
    %c0 = arith.constant 0 : index
    %c0_0 = arith.constant 0 : index
    %c0_1 = arith.constant 0 : index
    %0 = vector.load %arg2[%c0, %c0_0, %c0_1] : memref<2x8x256xf32, #tpu.memory_space<vmem>>, vector<2x8x256xf32>
    %c0_2 = arith.constant 0 : index
    %c0_3 = arith.constant 0 : index
    %c0_4 = arith.constant 0 : index
    %1 = vector.load %arg3[%c0_2, %c0_3, %c0_4] : memref<2x8x256xf32, #tpu.memory_space<vmem>>, vector<2x8x256xf32>
    %cst = arith.constant dense<0.000000e+00> : vector<2x8x8xf32>
    %2 = tpu.matmul %1, %0, %cst {dimension_numbers = #tpu.dot_dimension_numbers<[2], [2], [1], [1], [0, 0, 0, 1, 1, 1], [0], [0]>} : vector<2x8x256xf32>, vector<2x8x256xf32>, vector<2x8x8xf32> -> vector<2x8x8xf32>
    %cst_5 = arith.constant dense<0x7F800000> : vector<2x8xf32>
    %3 = vector.multi_reduction <minimumf>, %2, %cst_5 [2] : vector<2x8x8xf32> to vector<2x8xf32>
    %4 = vector.shape_cast %3 : vector<2x8xf32> to vector<2x8x1xf32>
    %5 = vector.broadcast %4 : vector<2x8x1xf32> to vector<2x8x8xf32>
    %6 = arith.subf %5, %2 : vector<2x8x8xf32>
    %7 = math.exp %6 : vector<2x8x8xf32>
    %cst_6 = arith.constant dense<0.000000e+00> : vector<2x8xf32>
    %8 = vector.multi_reduction <add>, %7, %cst_6 [2] : vector<2x8x8xf32> to vector<2x8xf32>
    %9 = vector.shape_cast %8 : vector<2x8xf32> to vector<2x8x1xf32>
    %10 = tpu.reciprocal %9 : vector<2x8x1xf32> -> vector<2x8x1xf32>
    %11 = vector.broadcast %10 : vector<2x8x1xf32> to vector<2x8x8xf32>
    %12 = arith.mulf %7, %11 : vector<2x8x8xf32>
    %cst_7 = arith.constant dense<0.000000e+00> : vector<2x8x256xf32>
    %13 = tpu.matmul %12, %0, %cst_7 {dimension_numbers = #tpu.dot_dimension_numbers<[2], [1], [1], [2], [0, 0, 0, 1, 1, 2], [0], [0]>} : vector<2x8x8xf32>, vector<2x8x256xf32>, vector<2x8x256xf32> -> vector<2x8x256xf32>
    %c0_8 = arith.constant 0 : index
    %14 = memref.load %arg1[%c0_8] : memref<1xf32, #tpu.memory_space<smem>>
    %15 = vector.broadcast %14 : f32 to vector<2x8x256xf32>
    %16 = arith.mulf %15, %13 : vector<2x8x256xf32>
    %17 = arith.addf %16, %1 : vector<2x8x256xf32>
    %c0_9 = arith.constant 0 : index
    %c0_10 = arith.constant 0 : index
    %c0_11 = arith.constant 0 : index
    %18 = vector.load %arg4[%c0_9, %c0_10, %c0_11] : memref<2x8x256xf32, #tpu.memory_space<vmem>>, vector<2x8x256xf32>
    tpu.vector_store %arg4[%c0_9, %c0_10, %c0_11], %17 {strides = array<i32>} : memref<2x8x256xf32, #tpu.memory_space<vmem>>, vector<2x8x256xf32>,
    return
  }
  func.func @transform_0(%arg0: i32) -> i32 {
    %c0_i32 = arith.constant 0 : i32
    %c0_i32_0 = arith.constant 0 : i32
    return %c0_i32 : i32
  }
  func.func @transform_1(%arg0: i32) -> (i32, i32, i32) {
    %c0_i32 = arith.constant 0 : i32
    %c0_i32_0 = arith.constant 0 : i32
    %c0_i32_1 = arith.constant 0 : i32
    return %arg0, %c0_i32, %c0_i32_0 : i32, i32, i32
  }
  func.func @transform_2(%arg0: i32) -> (i32, i32, i32) {
    %c0_i32 = arith.constant 0 : i32
    %c0_i32_0 = arith.constant 0 : i32
    %c0_i32_1 = arith.constant 0 : i32
    return %arg0, %c0_i32, %c0_i32_0 : i32, i32, i32
  }
  func.func @transform_3(%arg0: i32) -> (i32, i32, i32) {
    %c0_i32 = arith.constant 0 : i32
    %c0_i32_0 = arith.constant 0 : i32
    %c0_i32_1 = arith.constant 0 : i32
    return %arg0, %c0_i32, %c0_i32_0 : i32, i32, i32
  }
}

</mosaic_0001>

<llo_original>
// kernel: cam_forward.1
$region0: #{cam_forward.1}
  #allocation0 [shape = 'u32[]', space=smem, size = 0x4, offset = 0x4, fixed_abs, tag = 'smem constant byte address 0x4 - core index']
  #allocation1 [shape = 'u32[144,128]{1,0:T(1,128)}', space=vmem, size = 0x12000, scoped, tag = 'internal scratch']
  #allocation2 [shape = 'f32[1]{0:T(128)S(6)}', space=smem, size = 0x200, scoped, tag = 'scoped memory for cam_forward.1']
  %s0 = inlined_call_operand.<no memory space> [shape: f32[1], index: 0, kind: input, shape index: {}]
  %s1 = inlined_call_operand.vmem [shape: f32[2,8,256], index: 1, kind: input, shape index: {}]
  %s2 = inlined_call_operand.vmem [shape: f32[2,8,256], index: 2, kind: input, shape index: {}, may-alias: {2,3}]
  %s3 = inlined_call_operand.vmem [shape: f32[2,8,256], index: 3, kind: output, shape index: {}, may-alias: {2,3}]
  %s4 = sld [smem:[#allocation0]]
  $region22: #{cam_forward.1} parent=0
    _
  %s6 = ssub.s32 1, %s4
  %s7 = scalar_select 0, %s6, %s4
  %8 = sst [smem:[#allocation2]] %s0
  // Predicated region
  $region2: #{cam_forward.1} parent=0 // pred_check
    _
  $region3: #{cam_forward.1} parent=0 // pred_check_branch
    %10 = sbr.rel (0) target = $region5
  $region4: #{cam_forward.1} parent=0 // pred_region
    _
  $region5: #{cam_forward.1} parent=0 // pred_fallthru
    _
  // Predicated region
  $region6: #{cam_forward.1} parent=0 // pred_check
    _
  $region7: #{cam_forward.1} parent=0 // pred_check_branch
    %12 = sbr.rel (0) target = $region9
  $region8: #{cam_forward.1} parent=0 // pred_region
    _
  $region9: #{cam_forward.1} parent=0 // pred_fallthru
    _
  // Predicated region
  $region10: #{cam_forward.1} parent=0 // pred_check
    _
  $region11: #{cam_forward.1} parent=0 // pred_check_branch
    %14 = sbr.rel (0) target = $region13
  $region12: #{cam_forward.1} parent=0 // pred_region
    _
  $region13: #{cam_forward.1} parent=0 // pred_fallthru
    _
  %v15 = vld [vmem:[%s1] sm:$0xff]
  %v16 = vld [vmem:[%s1 + $0x8] sm:$0xff]
  %v17 = vld [vmem:[%s1 + $0x10] sm:$0xff]
  %v18 = vld [vmem:[%s1 + $0x18] sm:$0xff]
  %v19 = vld [vmem:[%s2] sm:$0xff]
  %v20 = vld [vmem:[%s2 + $0x8] sm:$0xff]
  %v21 = vld [vmem:[%s2 + $0x10] sm:$0xff]
  %v22 = vld [vmem:[%s2 + $0x18] sm:$0xff]
  %23 = vmatprep.subr.mxu0 %v16
  %24 = vmatpush1.xpose.msra.mxu0 %v15
  %25 = vmatprep.subr.mxu0 0.0
  %26 = vmatpush1.xpose.msra.mxu0 0.0
  %27 = vmatprep.subr.mxu0 0.0
  %28 = vmatpush1.xpose.msra.mxu0 0.0
  %29 = vmatprep.subr.mxu0 0.0
  %30 = vmatpush1.xpose.msra.mxu0 0.0
  %31 = vmatprep.subr.mxu0 0.0
  %32 = vmatpush1.xpose.msra.mxu0 0.0
  %33 = vmatprep.subr.mxu0 0.0
  %34 = vmatpush1.xpose.msra.mxu0 0.0
  %35 = vmatprep.subr.mxu0 0.0
  %36 = vmatpush1.xpose.msra.mxu0 0.0
  %37 = vmatprep.subr.mxu0 0.0
  %38 = vmatpush1.xpose.msra.mxu0 0.0
  %39 = vmatprep.subr.mxu0 0.0
  %40 = vmatpush1.xpose.msra.mxu0 0.0
  %41 = vmatprep.subr.mxu0 0.0
  %42 = vmatpush1.xpose.msra.mxu0 0.0
  %43 = vmatprep.subr.mxu0 0.0
  %44 = vmatpush1.xpose.msra.mxu0 0.0
  %45 = vmatprep.subr.mxu0 0.0
  %46 = vmatpush1.xpose.msra.mxu0 0.0
  %47 = vmatprep.subr.mxu0 0.0
  %48 = vmatpush1.xpose.msra.mxu0 0.0
  %49 = vmatprep.subr.mxu0 0.0
  %50 = vmatpush1.xpose.msra.mxu0 0.0
  %51 = vmatprep.subr.mxu0 0.0
  %52 = vmatpush1.xpose.msra.mxu0 0.0
  %53 = vmatprep.subr.mxu0 0.0
  %54 = vmatpush1.xpose.msra.mxu0 0.0
  %55 = vmatprep.subr.mxu0 0.0
  %56 = vmatpush1.xpose.msra.mxu0 0.0
  %57 = vmatprep.subr.mxu0 0.0
  %58 = vmatpush1.xpose.msra.mxu0 0.0
  %59 = vmatprep.subr.mxu0 0.0
  %60 = vmatpush1.xpose.msra.mxu0 0.0
  %61 = vmatprep.subr.mxu0 0.0
  %62 = vmatpush1.xpose.msra.mxu0 0.0
  %63 = vmatprep.subr.mxu0 0.0
  %64 = vmatpush1.xpose.msra.mxu0 0.0
  %65 = vmatprep.subr.mxu0 0.0
  %66 = vmatpush1.xpose.msra.mxu0 0.0
  %67 = vmatprep.subr.mxu0 0.0
  %68 = vmatpush1.xpose.msra.mxu0 0.0
  %69 = vmatprep.subr.mxu0 0.0
  %70 = vmatpush1.xpose.msra.mxu0 0.0
  %71 = vmatprep.subr.mxu0 0.0
  %72 = vmatpush1.xpose.msra.mxu0 0.0
  %73 = vmatprep.subr.mxu0 0.0
  %74 = vmatpush1.xpose.msra.mxu0 0.0
  %75 = vmatprep.subr.mxu0 0.0
  %76 = vmatpush1.xpose.msra.mxu0 0.0
  %77 = vmatprep.subr.mxu0 0.0
  %78 = vmatpush1.xpose.msra.mxu0 0.0
  %79 = vmatprep.subr.mxu0 0.0
  %80 = vmatpush1.xpose.msra.mxu0 0.0
  %81 = vmatprep.subr.mxu0 0.0
  %82 = vmatpush1.xpose.msra.mxu0 0.0
  %83 = vmatprep.subr.mxu0 0.0
  %84 = vmatpush1.xpose.msra.mxu0 0.0
  %85 = vmatprep.subr.mxu0 0.0
  %86 = vmatpush1.xpose.msra.mxu0 0.0
  %87 = vmatprep.mubr.f32.mxu0 %v20
  %88 = vmatmul.mubr.f32.gmra.mrb[0].mxu0 %v19
  %v89 = vpop.f32.mrb[0].mxu0
  %v90 = vadd.f32 0.0, %v89
  %v91 = vpop.f32.mrb[0].mxu0
  %92 = vdwg.mxu0
  %93 = vmatprep.subr.mxu0 %v18
  %94 = vmatpush1.xpose.msra.mxu0 %v17
  %95 = vmatprep.subr.mxu0 0.0
  %96 = vmatpush1.xpose.msra.mxu0 0.0
  %97 = vmatprep.subr.mxu0 0.0
  %98 = vmatpush1.xpose.msra.mxu0 0.0
  %99 = vmatprep.subr.mxu0 0.0
  %100 = vmatpush1.xpose.msra.mxu0 0.0
  %101 = vmatprep.subr.mxu0 0.0
  %102 = vmatpush1.xpose.msra.mxu0 0.0
  %103 = vmatprep.subr.mxu0 0.0
  %104 = vmatpush1.xpose.msra.mxu0 0.0
  %105 = vmatprep.subr.mxu0 0.0
  %106 = vmatpush1.xpose.msra.mxu0 0.0
  %107 = vmatprep.subr.mxu0 0.0
  %108 = vmatpush1.xpose.msra.mxu0 0.0
  %109 = vmatprep.subr.mxu0 0.0
  %110 = vmatpush1.xpose.msra.mxu0 0.0
  %111 = vmatprep.subr.mxu0 0.0
  %112 = vmatpush1.xpose.msra.mxu0 0.0
  %113 = vmatprep.subr.mxu0 0.0
  %114 = vmatpush1.xpose.msra.mxu0 0.0
  %115 = vmatprep.subr.mxu0 0.0
  %116 = vmatpush1.xpose.msra.mxu0 0.0
  %117 = vmatprep.subr.mxu0 0.0
  %118 = vmatpush1.xpose.msra.mxu0 0.0
  %119 = vmatprep.subr.mxu0 0.0
  %120 = vmatpush1.xpose.msra.mxu0 0.0
  %121 = vmatprep.subr.mxu0 0.0
  %122 = vmatpush1.xpose.msra.mxu0 0.0
  %123 = vmatprep.subr.mxu0 0.0
  %124 = vmatpush1.xpose.msra.mxu0 0.0
  %125 = vmatprep.subr.mxu0 0.0
  %126 = vmatpush1.xpose.msra.mxu0 0.0
  %127 = vmatprep.subr.mxu0 0.0
  %128 = vmatpush1.xpose.msra.mxu0 0.0
  %129 = vmatprep.subr.mxu0 0.0
  %130 = vmatpush1.xpose.msra.mxu0 0.0
  %131 = vmatprep.subr.mxu0 0.0
  %132 = vmatpush1.xpose.msra.mxu0 0.0
  %133 = vmatprep.subr.mxu0 0.0
  %134 = vmatpush1.xpose.msra.mxu0 0.0
  %135 = vmatprep.subr.mxu0 0.0
  %136 = vmatpush1.xpose.msra.mxu0 0.0
  %137 = vmatprep.subr.mxu0 0.0
  %138 = vmatpush1.xpose.msra.mxu0 0.0
  %139 = vmatprep.subr.mxu0 0.0
  %140 = vmatpush1.xpose.msra.mxu0 0.0
  %141 = vmatprep.subr.mxu0 0.0
  %142 = vmatpush1.xpose.msra.mxu0 0.0
  %143 = vmatprep.subr.mxu0 0.0
  %144 = vmatpush1.xpose.msra.mxu0 0.0
  %145 = vmatprep.subr.mxu0 0.0
  %146 = vmatpush1.xpose.msra.mxu0 0.0
  %147 = vmatprep.subr.mxu0 0.0
  %148 = vmatpush1.xpose.msra.mxu0 0.0
  %149 = vmatprep.subr.mxu0 0.0
  %150 = vmatpush1.xpose.msra.mxu0 0.0
  %151 = vmatprep.subr.mxu0 0.0
  %152 = vmatpush1.xpose.msra.mxu0 0.0
  %153 = vmatprep.subr.mxu0 0.0
  %154 = vmatpush1.xpose.msra.mxu0 0.0
  %155 = vmatprep.subr.mxu0 0.0
  %156 = vmatpush1.xpose.msra.mxu0 0.0
  %157 = vmatprep.mubr.f32.mxu0 %v22
  %158 = vmatmul.mubr.f32.gmra.mrb[0].mxu0 %v21
  %v159 = vpop.f32.mrb[0].mxu0
  %v160 = vadd.f32 0.0, %v159
  %v161 = vpop.f32.mrb[0].mxu0
  %162 = vdwg.mxu0
  %vm163 = vcmask 64512
  %v164 = vsel %vm163, %v90, inf
  %165 = vmin.xlane.f32.xlu0 %v164
  %v166 = vpop.xlane.xlu0 %165
  %v167 = vsel %vm163, %v160, inf
  %168 = vmin.xlane.f32.xlu0 %v167
  %v169 = vpop.xlane.xlu0 %168
  %v170 = vsub.f32 %v166, %v90
  %v171 = vsub.f32 %v169, %v160
  %v172 = vmul.f32 %v170, 1.442695
  %v173 = vpow.pop %v172
  %v174 = vmul.f32 %v171, 1.442695
  %v175 = vpow.pop %v174
  %v176 = vsel %vm163, %v173, 0.0
  %177 = vadd.xlane.f32.xlu0 %v176
  %v178 = vpop.xlane.xlu0 %177
  %v179 = vsel %vm163, %v175, 0.0
  %180 = vadd.xlane.f32.xlu0 %v179
  %v181 = vpop.xlane.xlu0 %180
  %v182 = vrcp.pop %v178
  %v183 = vrcp.pop %v181
  %v184 = vmul.f32 %v173, %v182
  %v185 = vmul.f32 %v175, %v183
  %v187 = vsel %vm163, %v184, 0
  %189 = vmatprep.subr.mxu0 %v16
  %190 = vmatpush1.msra.mxu0 %v15
  %191 = vmatprep.subr.mxu0 0.0
  %192 = vmatpush1.msra.mxu0 0.0
  %193 = vmatprep.subr.mxu0 0.0
  %194 = vmatpush1.msra.mxu0 0.0
  %195 = vmatprep.subr.mxu0 0.0
  %196 = vmatpush1.msra.mxu0 0.0
  %197 = vmatprep.subr.mxu0 0.0
  %198 = vmatpush1.msra.mxu0 0.0
  %199 = vmatprep.subr.mxu0 0.0
  %200 = vmatpush1.msra.mxu0 0.0
  %201 = vmatprep.subr.mxu0 0.0
  %202 = vmatpush1.msra.mxu0 0.0
  %203 = vmatprep.subr.mxu0 0.0
  %204 = vmatpush1.msra.mxu0 0.0
  %205 = vmatprep.subr.mxu0 0.0
  %206 = vmatpush1.msra.mxu0 0.0
  %207 = vmatprep.subr.mxu0 0.0
  %208 = vmatpush1.msra.mxu0 0.0
  %209 = vmatprep.subr.mxu0 0.0
  %210 = vmatpush1.msra.mxu0 0.0
  %211 = vmatprep.subr.mxu0 0.0
  %212 = vmatpush1.msra.mxu0 0.0
  %213 = vmatprep.subr.mxu0 0.0
  %214 = vmatpush1.msra.mxu0 0.0
  %215 = vmatprep.subr.mxu0 0.0
  %216 = vmatpush1.msra.mxu0 0.0
  %217 = vmatprep.subr.mxu0 0.0
  %218 = vmatpush1.msra.mxu0 0.0
  %219 = vmatprep.subr.mxu0 0.0
  %220 = vmatpush1.msra.mxu0 0.0
  %221 = vmatprep.subr.mxu0 0.0
  %222 = vmatpush1.msra.mxu0 0.0
  %223 = vmatprep.subr.mxu0 0.0
  %224 = vmatpush1.msra.mxu0 0.0
  %225 = vmatprep.subr.mxu0 0.0
  %226 = vmatpush1.msra.mxu0 0.0
  %227 = vmatprep.subr.mxu0 0.0
  %228 = vmatpush1.msra.mxu0 0.0
  %229 = vmatprep.subr.mxu0 0.0
  %230 = vmatpush1.msra.mxu0 0.0
  %231 = vmatprep.subr.mxu0 0.0
  %232 = vmatpush1.msra.mxu0 0.0
  %233 = vmatprep.subr.mxu0 0.0
  %234 = vmatpush1.msra.mxu0 0.0
  %235 = vmatprep.subr.mxu0 0.0
  %236 = vmatpush1.msra.mxu0 0.0
  %237 = vmatprep.subr.mxu0 0.0
  %238 = vmatpush1.msra.mxu0 0.0
  %239 = vmatprep.subr.mxu0 0.0
  %240 = vmatpush1.msra.mxu0 0.0
  %241 = vmatprep.subr.mxu0 0.0
  %242 = vmatpush1.msra.mxu0 0.0
  %243 = vmatprep.subr.mxu0 0.0
  %244 = vmatpush1.msra.mxu0 0.0
  %245 = vmatprep.subr.mxu0 0.0
  %246 = vmatpush1.msra.mxu0 0.0
  %247 = vmatprep.subr.mxu0 0.0
  %248 = vmatpush1.msra.mxu0 0.0
  %249 = vmatprep.subr.mxu0 0.0
  %250 = vmatpush1.msra.mxu0 0.0
  %251 = vmatprep.subr.mxu0 0.0
  %252 = vmatpush1.msra.mxu0 0.0
  %253 = vmatprep.mubr.f32.mxu0 0.0
  %254 = vmatmul.mubr.f32.gmra.mrb[0].mxu0 %v187
  %v255 = vpop.f32.mrb[0].mxu0
  %v256 = vadd.f32 0.0, %v255
  %v257 = vpop.f32.mrb[0].mxu0
  %v258 = vadd.f32 0.0, %v257
  %259 = vdwg.mxu0
  %v261 = vsel %vm163, %v185, 0
  %263 = vmatprep.subr.mxu0 %v18
  %264 = vmatpush1.msra.mxu0 %v17
  %265 = vmatprep.subr.mxu0 0.0
  %266 = vmatpush1.msra.mxu0 0.0
  %267 = vmatprep.subr.mxu0 0.0
  %268 = vmatpush1.msra.mxu0 0.0
  %269 = vmatprep.subr.mxu0 0.0
  %270 = vmatpush1.msra.mxu0 0.0
  %271 = vmatprep.subr.mxu0 0.0
  %272 = vmatpush1.msra.mxu0 0.0
  %273 = vmatprep.subr.mxu0 0.0
  %274 = vmatpush1.msra.mxu0 0.0
  %275 = vmatprep.subr.mxu0 0.0
  %276 = vmatpush1.msra.mxu0 0.0
  %277 = vmatprep.subr.mxu0 0.0
  %278 = vmatpush1.msra.mxu0 0.0
  %279 = vmatprep.subr.mxu0 0.0
  %280 = vmatpush1.msra.mxu0 0.0
  %281 = vmatprep.subr.mxu0 0.0
  %282 = vmatpush1.msra.mxu0 0.0
  %283 = vmatprep.subr.mxu0 0.0
  %284 = vmatpush1.msra.mxu0 0.0
  %285 = vmatprep.subr.mxu0 0.0
  %286 = vmatpush1.msra.mxu0 0.0
  %287 = vmatprep.subr.mxu0 0.0
  %288 = vmatpush1.msra.mxu0 0.0
  %289 = vmatprep.subr.mxu0 0.0
  %290 = vmatpush1.msra.mxu0 0.0
  %291 = vmatprep.subr.mxu0 0.0
  %292 = vmatpush1.msra.mxu0 0.0
  %293 = vmatprep.subr.mxu0 0.0
  %294 = vmatpush1.msra.mxu0 0.0
  %295 = vmatprep.subr.mxu0 0.0
  %296 = vmatpush1.msra.mxu0 0.0
  %297 = vmatprep.subr.mxu0 0.0
  %298 = vmatpush1.msra.mxu0 0.0
  %299 = vmatprep.subr.mxu0 0.0
  %300 = vmatpush1.msra.mxu0 0.0
  %301 = vmatprep.subr.mxu0 0.0
  %302 = vmatpush1.msra.mxu0 0.0
  %303 = vmatprep.subr.mxu0 0.0
  %304 = vmatpush1.msra.mxu0 0.0
  %305 = vmatprep.subr.mxu0 0.0
  %306 = vmatpush1.msra.mxu0 0.0
  %307 = vmatprep.subr.mxu0 0.0
  %308 = vmatpush1.msra.mxu0 0.0
  %309 = vmatprep.subr.mxu0 0.0
  %310 = vmatpush1.msra.mxu0 0.0
  %311 = vmatprep.subr.mxu0 0.0
  %312 = vmatpush1.msra.mxu0 0.0
  %313 = vmatprep.subr.mxu0 0.0
  %314 = vmatpush1.msra.mxu0 0.0
  %315 = vmatprep.subr.mxu0 0.0
  %316 = vmatpush1.msra.mxu0 0.0
  %317 = vmatprep.subr.mxu0 0.0
  %318 = vmatpush1.msra.mxu0 0.0
  %319 = vmatprep.subr.mxu0 0.0
  %320 = vmatpush1.msra.mxu0 0.0
  %321 = vmatprep.subr.mxu0 0.0
  %322 = vmatpush1.msra.mxu0 0.0
  %323 = vmatprep.subr.mxu0 0.0
  %324 = vmatpush1.msra.mxu0 0.0
  %325 = vmatprep.subr.mxu0 0.0
  %326 = vmatpush1.msra.mxu0 0.0
  %327 = vmatprep.mubr.f32.mxu0 0.0
  %328 = vmatmul.mubr.f32.gmra.mrb[0].mxu0 %v261
  %v329 = vpop.f32.mrb[0].mxu0
  %v330 = vadd.f32 0.0, %v329
  %v331 = vpop.f32.mrb[0].mxu0
  %v332 = vadd.f32 0.0, %v331
  %333 = vdwg.mxu0
  %s334 = sld [smem:[#allocation2]]
  %v335 = vstv %s334
  %v336 = vmul.f32 %v335, %v256
  %v337 = vmul.f32 %v335, %v258
  %v338 = vmul.f32 %v335, %v330
  %v339 = vmul.f32 %v335, %v332
  %v340 = vadd.f32 %v336, %v19
  %v341 = vadd.f32 %v337, %v20
  %v342 = vadd.f32 %v338, %v21
  %v343 = vadd.f32 %v339, %v22
  %344 = vst [vmem:[%s3] sm:$0xff] %v340
  %345 = vst [vmem:[%s3 + $0x8] sm:$0xff] %v341
  %346 = vst [vmem:[%s3 + $0x10] sm:$0xff] %v342
  %347 = vst [vmem:[%s3 + $0x18] sm:$0xff] %v343
  // Predicated region
  $region14: #{cam_forward.1} parent=0 // pred_check
    _
  $region15: #{cam_forward.1} parent=0 // pred_check_branch
    %349 = sbr.rel (0) target = $region17
  $region16: #{cam_forward.1} parent=0 // pred_region
    _
  $region17: #{cam_forward.1} parent=0 // pred_fallthru
    _
  // Predicated region
  $region18: #{cam_forward.1} parent=0 // pred_check
    _
  $region19: #{cam_forward.1} parent=0 // pred_check_branch
    %351 = sbr.rel (0) target = $region21
  $region20: #{cam_forward.1} parent=0 // pred_region
    _
  $region21: #{cam_forward.1} parent=0 // pred_fallthru
    _

</llo_original>
